<compile_context>
chip_gen: v5e
topology: v5e:2x2
jax: 0.10.0
libtpu: 0.0.40
codegen_flags: <defaults>
</compile_context>

<pallas_src>
import math
from functools import partial

import jax
import jax.numpy as jnp
from jax.experimental import pallas as pl
from jax.experimental.pallas import tpu as pltpu


def _round_up(x, m):
    return ((x + m - 1) // m) * m


def _vmem_limit_bytes():
    """~80% of physical VMEM (51 MiB on v7x, ~102 MiB on v5e/v6e)."""
    try:
        cap = int(pltpu.get_tpu_info().vmem_capacity_bytes)
        return max(32 * 1024 * 1024, min(int(cap * 0.8), 112 * 1024 * 1024))
    except Exception:
        return 48 * 1024 * 1024


# --------------------------------------------------------------------------
# Kernel 1: fused QKV projection (plain tiled matmul, lane-dense output)
# --------------------------------------------------------------------------
def _qkv_proj_kernel(x_ref, w_ref, b_ref, out_ref):
    # x_ref: (TR, E), w_ref: (E, 3E) pre-transposed (+ Q columns pre-scaled),
    # b_ref: (1, 3E), out_ref: (TR, 3E)
    out_ref[...] = (
        jnp.dot(x_ref[...], w_ref[...], preferred_element_type=jnp.float32)
        + b_ref[...]
    ).astype(out_ref.dtype)


# --------------------------------------------------------------------------
# Kernel 2: flash-style attention + fused output projection
# --------------------------------------------------------------------------
def _flash_attn_kernel(q_ref, k_ref, v_ref, bias_ref, wo_ref, bo_ref, out_ref,
                       m_scr, l_scr, acc_scr, *, num_heads, head_dim):
    # q_ref:    (1, H, TQ, D)   softmax scale already folded into Wq
    # k_ref:    (1, H, TK, D)   current key block (streamed over grid axis 2)
    # v_ref:    (1, H, TK, D)
    # bias_ref: (1, 1, TK)      additive key-padding bias (0 valid / -inf pad)
    # wo_ref:   (H, D, E)       out-projection weight, pre-transposed, per head
    # bo_ref:   (1, E)
    # out_ref:  (1, TQ, E)
    # m_scr/l_scr: (H, TQ, 1)   online-softmax running max / denom
    # acc_scr:     (H, TQ, D)   unnormalized context accumulator
    H, D = num_heads, head_dim
    ki = pl.program_id(2)

    @pl.when(ki == 0)
    def _init():
        # finite "-inf" so a fully masked key block never yields exp(-inf+inf)=NaN
        m_scr[...] = jnp.full(m_scr.shape, -1e30, jnp.float32)
        l_scr[...] = jnp.zeros(l_scr.shape, jnp.float32)
        acc_scr[...] = jnp.zeros(acc_scr.shape, jnp.float32)

    q = q_ref[0]                                                     # (H, TQ, D)
    k = k_ref[0]                                                     # (H, TK, D)
    v = v_ref[0]                                                     # (H, TK, D)

    s = jnp.einsum('hqd,hkd->hqk', q, k,
                   preferred_element_type=jnp.float32)               # (H, TQ, TK)
    s = s + bias_ref[...]                                            # broadcast bias

    m_prev = m_scr[...]
    m_new = jnp.maximum(m_prev, jnp.max(s, axis=-1, keepdims=True))
    alpha = jnp.exp(m_prev - m_new)
    p = jnp.exp(s - m_new)
    l_scr[...] = alpha * l_scr[...] + jnp.sum(p, axis=-1, keepdims=True)
    acc_scr[...] = alpha * acc_scr[...] + jnp.einsum(
        'hqk,hkd->hqd', p, v, preferred_element_type=jnp.float32)
    m_scr[...] = m_new

    @pl.when(ki == pl.num_programs(2) - 1)
    def _finalize():
        # deferred normalization: scale the (H,TQ,D) context, not (H,TQ,S) probs
        ctx = acc_scr[...] * pl.reciprocal(l_scr[...], approx=True)  # (H, TQ, D)
        wo = wo_ref[...]                                             # (H, D, E)
        # Fused out-projection, accumulated per head (no (H,TQ,E) intermediate,
        # no separate head-sum pass).  A single full-depth dot_general with two
        # contracting dims is not reliably lowered by Mosaic, hence the static
        # unroll over H.
        acc_out = jnp.dot(ctx[0], wo[0], preferred_element_type=jnp.float32)
        for h in range(1, H):
            acc_out = acc_out + jnp.dot(ctx[h], wo[h],
                                        preferred_element_type=jnp.float32)
        out_ref[0] = (acc_out + bo_ref[...]).astype(out_ref.dtype)


# --------------------------------------------------------------------------
# Wrapper
# --------------------------------------------------------------------------
def multihead_attention(x, params, num_heads, mask=None):
    """x: (B, S, E) float32; mask: optional (B, S) with 1=valid, 0=pad."""
    B, S, E = x.shape
    H = num_heads
    D = E // H
    wq, bq, wk, bk, wv, bv, wo, bo = params
    # Forward uses x for q, k AND v projections -> requires kdim == vdim == E.
    assert wk.shape[1] == E and wv.shape[1] == E, "kernel supports kdim == vdim == embed_dim"

    vmem_budget = _vmem_limit_bytes()

    # --- host-side layout plumbing (free): fold scale, fuse & pre-transpose ---
    scale = 1.0 / math.sqrt(D)
    w_qkv = jnp.concatenate([wq.T * scale, wk.T, wv.T], axis=1)      # (E, 3E)
    b_qkv = jnp.concatenate([bq * scale, bk, bv], axis=1)            # (1, 3E)
    wo_h = wo.T.reshape(H, D, E)                                     # per-head out-proj

    # --- tiling / sequence padding ---
    if S >= 128:
        tq = tk = 128
        s_pad = _round_up(S, 128)
    else:
        tq = tk = _round_up(S, 8)
        s_pad = tq

    if mask is None:
        mask_f = jnp.ones((B, S), dtype=jnp.float32)
    else:
        mask_f = mask.astype(jnp.float32)

    if s_pad != S:
        x_p = jnp.pad(x, ((0, 0), (0, s_pad - S), (0, 0)))
        mask_f = jnp.pad(mask_f, ((0, 0), (0, s_pad - S)))           # padded keys masked
    else:
        x_p = x

    # additive key-padding bias, computed once (not per head / per block).
    # -inf keeps exact PyTorch semantics (fully-masked rows -> NaN, as in torch).
    mask_bias = jnp.where(mask_f > 0.0, 0.0, -jnp.inf).astype(jnp.float32)
    mask_bias = mask_bias.reshape(B, 1, s_pad)

    # ---- kernel 1: fused QKV projection over flattened (B*S_pad, E) rows ----
    R = B * s_pad
    x2d = x_p.reshape(R, E)
    qkv2d = pl.pallas_call(
        _qkv_proj_kernel,
        out_shape=jax.ShapeDtypeStruct((R, 3 * E), jnp.float32),
        grid=(R // tq,),
        in_specs=[
            pl.BlockSpec((tq, E), lambda r: (r, 0)),
            pl.BlockSpec((E, 3 * E), lambda r: (0, 0)),
            pl.BlockSpec((1, 3 * E), lambda r: (0, 0)),
        ],
        out_specs=pl.BlockSpec((tq, 3 * E), lambda r: (r, 0)),
        compiler_params=pltpu.CompilerParams(
            dimension_semantics=("parallel",),
            vmem_limit_bytes=vmem_budget,
        ),
    )(x2d, w_qkv, b_qkv)

    # head-major rearrangement (mirrors einops 'b s (h d) -> b h s d'); pure
    # layout plumbing done by XLA between the two pallas_calls.
    qkv = qkv2d.reshape(B, s_pad, 3, H, D)
    qkv_hm = jnp.transpose(qkv, (2, 0, 3, 1, 4))                     # (3, B, H, S_pad, D)
    q_hm, k_hm, v_hm = qkv_hm[0], qkv_hm[1], qkv_hm[2]

    # ---- kernel 2: flash attention (K/V streamed) + fused out-projection ----
    n_q = s_pad // tq
    n_k = s_pad // tk
    kernel = partial(_flash_attn_kernel, num_heads=H, head_dim=D)

    out = pl.pallas_call(
        kernel,
        out_shape=jax.ShapeDtypeStruct((B, s_pad, E), x.dtype),
        grid=(B, n_q, n_k),
        in_specs=[
            pl.BlockSpec((1, H, tq, D), lambda b, qi, ki: (b, 0, qi, 0)),  # Q block
            pl.BlockSpec((1, H, tk, D), lambda b, qi, ki: (b, 0, ki, 0)),  # K block
            pl.BlockSpec((1, H, tk, D), lambda b, qi, ki: (b, 0, ki, 0)),  # V block
            pl.BlockSpec((1, 1, tk),    lambda b, qi, ki: (b, 0, ki)),     # key-pad bias
            pl.BlockSpec((H, D, E),     lambda b, qi, ki: (0, 0, 0)),      # out-proj W
            pl.BlockSpec((1, E),        lambda b, qi, ki: (0, 0)),         # out-proj b
        ],
        out_specs=pl.BlockSpec((1, tq, E), lambda b, qi, ki: (b, qi, 0)),
        scratch_shapes=[
            pltpu.VMEM((H, tq, 1), jnp.float32),   # running max
            pltpu.VMEM((H, tq, 1), jnp.float32),   # running denom
            pltpu.VMEM((H, tq, D), jnp.float32),   # unnormalized context
        ],
        compiler_params=pltpu.CompilerParams(
            dimension_semantics=("parallel", "parallel", "arbitrary"),
            vmem_limit_bytes=vmem_budget,
        ),
    )(q_hm, k_hm, v_hm, mask_bias, wo_h, bo)

    return out[:, :S, :]


# --------------------------------------------------------------------------
# Parameter init + pure-JAX reference
# --------------------------------------------------------------------------
def init_params(key, embed_dim, kdim, vdim):
    """Deterministic nn.Linear-style init (uniform(-1/sqrt(in), 1/sqrt(in)))."""
    def linear(k, out_f, in_f):
        k1, k2 = jax.random.split(k)
        bound = 1.0 / math.sqrt(in_f)
        w = jax.random.uniform(k1, (out_f, in_f), jnp.float32, -bound, bound)
        b = jax.random.uniform(k2, (1, out_f), jnp.float32, -bound, bound)
        return w, b

    kq, kk, kv, ko = jax.random.split(key, 4)
    wq, bq = linear(kq, embed_dim, embed_dim)
    wk, bk = linear(kk, embed_dim, kdim)
    wv, bv = linear(kv, embed_dim, vdim)
    wo, bo = linear(ko, embed_dim, embed_dim)
    return (wq, bq, wk, bk, wv, bv, wo, bo)


def reference_mha(x, params, num_heads, mask=None):
    """Pure-JAX reference mirroring the PyTorch forward."""
    wq, bq, wk, bk, wv, bv, wo, bo = params
    B, S, E = x.shape
    D = E // num_heads
    q = x @ wq.T + bq
    k = x @ wk.T + bk
    v = x @ wv.T + bv
    q = q.reshape(B, S, num_heads, D).transpose(0, 2, 1, 3)
    k = k.reshape(B, S, num_heads, D).transpose(0, 2, 1, 3)
    v = v.reshape(B, S, num_heads, D).transpose(0, 2, 1, 3)
    dot = (q @ k.transpose(0, 1, 3, 2)) / math.sqrt(D)
    if mask is not None:
        m = (mask > 0)[:, None, None, :]
        dot = jnp.where(m, dot, -jnp.inf)
    p = jax.nn.softmax(dot, axis=-1)
    o = (p @ v).transpose(0, 2, 1, 3).reshape(B, S, E)
    return o @ wo.T + bo


if __name__ == "__main__":
    # Module config: embed_dim=32, num_heads=4, dropout=0.0, bias=True,
    # kdim=vdim=32, batch_first=True
    B, S, E, H = 2, 8, 32, 4
    key = jax.random.PRNGKey(0)
    kx, km, kp = jax.random.split(key, 3)

    x = jax.random.normal(kx, (B, S, E), dtype=jnp.float32)
    # mask: 1 = valid token, 0 = padding (last two tokens of batch 1 padded)
    mask = jnp.ones((B, S), dtype=jnp.float32).at[1, -2:].set(0.0)
    params = init_params(kp, E, E, E)

    out = multihead_attention(x, params, H, mask=mask)
    out = jax.block_until_ready(out)

    ref = reference_mha(x, params, H, mask=mask)
    assert out.shape == (B, S, E)
    # tolerance accounts for the EUP approximate reciprocal in the softmax
    assert jnp.allclose(out, ref, atol=5e-3, rtol=5e-3), "mismatch vs reference"

    print("KERNEL_OK")
</pallas_src>

<mosaic_0001>
module attributes {stable_mosaic.version = 11 : i64} {
  func.func @_qkv_proj_kernel(%arg0: i32, %arg1: memref<8x32xf32, #tpu.memory_space<vmem>>, %arg2: memref<32x96xf32, #tpu.memory_space<vmem>>, %arg3: memref<1x96xf32, #tpu.memory_space<vmem>>, %arg4: memref<8x96xf32, #tpu.memory_space<vmem>>) attributes {dimension_semantics = [#tpu.dimension_semantics<parallel>], iteration_bounds = array<i64: 2>, scalar_prefetch = 0 : i64, scratch_operands = 0 : i64, tpu.core_type = #tpu.core_type<tc>, window_params = [{transform_indices = @transform_0, window_bounds = array<i64: 8, 32>}, {pipeline_mode = #tpu.pipeline_mode<synchronous>, transform_indices = @transform_1, window_bounds = array<i64: 32, 96>}, {pipeline_mode = #tpu.pipeline_mode<synchronous>, transform_indices = @transform_2, window_bounds = array<i64: 1, 96>}, {transform_indices = @transform_3, window_bounds = array<i64: 8, 96>}]} {
    %c0 = arith.constant 0 : index
    %c0_0 = arith.constant 0 : index
    %0 = vector.load %arg1[%c0, %c0_0] : memref<8x32xf32, #tpu.memory_space<vmem>>, vector<8x32xf32>
    %c0_1 = arith.constant 0 : index
    %c0_2 = arith.constant 0 : index
    %1 = vector.load %arg2[%c0_1, %c0_2] : memref<32x96xf32, #tpu.memory_space<vmem>>, vector<32x96xf32>
    %cst = arith.constant dense<0.000000e+00> : vector<8x96xf32>
    %2 = tpu.matmul %0, %1, %cst {dimension_numbers = #tpu.dot_dimension_numbers<[1], [0], [0], [1], [0, 0, 1, 1], [], []>} : vector<8x32xf32>, vector<32x96xf32>, vector<8x96xf32> -> vector<8x96xf32>
    %c0_3 = arith.constant 0 : index
    %c0_4 = arith.constant 0 : index
    %3 = vector.load %arg3[%c0_3, %c0_4] : memref<1x96xf32, #tpu.memory_space<vmem>>, vector<1x96xf32>
    %4 = vector.broadcast %3 : vector<1x96xf32> to vector<8x96xf32>
    %5 = arith.addf %2, %4 : vector<8x96xf32>
    %c0_5 = arith.constant 0 : index
    %c0_6 = arith.constant 0 : index
    %6 = vector.load %arg4[%c0_5, %c0_6] : memref<8x96xf32, #tpu.memory_space<vmem>>, vector<8x96xf32>
    tpu.vector_store %arg4[%c0_5, %c0_6], %5 {strides = array<i32>} : memref<8x96xf32, #tpu.memory_space<vmem>>, vector<8x96xf32>,
    return
  }
  func.func @transform_0(%arg0: i32) -> (i32, i32) {
    %c0_i32 = arith.constant 0 : i32
    %c0_i32_0 = arith.constant 0 : i32
    return %arg0, %c0_i32 : i32, i32
  }
  func.func @transform_1(%arg0: i32) -> (i32, i32) {
    %c0_i32 = arith.constant 0 : i32
    %c0_i32_0 = arith.constant 0 : i32
    %c0_i32_1 = arith.constant 0 : i32
    return %c0_i32, %c0_i32_0 : i32, i32
  }
  func.func @transform_2(%arg0: i32) -> (i32, i32) {
    %c0_i32 = arith.constant 0 : i32
    %c0_i32_0 = arith.constant 0 : i32
    %c0_i32_1 = arith.constant 0 : i32
    return %c0_i32, %c0_i32_0 : i32, i32
  }
  func.func @transform_3(%arg0: i32) -> (i32, i32) {
    %c0_i32 = arith.constant 0 : i32
    %c0_i32_0 = arith.constant 0 : i32
    return %arg0, %c0_i32 : i32, i32
  }
}

</mosaic_0001>

<llo_original>
// kernel: tpu_custom_call.1
$region0: #{tpu_custom_call.1}
  #allocation0 [shape = 'u32[]', space=smem, size = 0x4, offset = 0x4, fixed_abs, tag = 'smem constant byte address 0x4 - core index']
  #allocation1 [shape = 'u32[72,128]{1,0:T(1,128)}', space=vmem, size = 0x9000, scoped, tag = 'internal scratch']
  %s0 = inlined_call_operand.hbm [shape: f32[16,32], index: 0, kind: input, shape index: {}]
  %s1 = inlined_call_operand.hbm [shape: f32[32,96], index: 1, kind: input, shape index: {}]
  %s2 = inlined_call_operand.vmem [shape: f32[1,96], index: 2, kind: input, shape index: {}]
  %s3 = inlined_call_operand.hbm [shape: f32[16,96], index: 3, kind: output, shape index: {}]
  %s4 = sld [smem:[#allocation0]]
  $region53: #{tpu_custom_call.1} parent=0
    _
  %s6 = ssub.s32 1, %s4
  %s7 = scalar_select 0, %s6, %s4
  $region1: #{tpu_custom_call.1} parent=0
    #allocation2 [shape = 'u8[8192]{0}', space=vmem, size = 0x2000, scoped, tag = 'input window, operand 0']
    #allocation3 [shape = 's32[2]{0}', space=sflag, size = 0x8, scoped, tag = 'scoped memory for tpu_custom_call.1']
    #allocation4 [shape = 's32[2]{0}', space=sflag, size = 0x8, scoped, tag = 'scoped memory for tpu_custom_call.1']
    #allocation5 [shape = 'u8[16384]{0}', space=vmem, size = 0x4000, scoped, tag = 'input window, operand 1, single buffered']
    #allocation6 [shape = 's32[1]{0}', space=sflag, size = 0x4, scoped, tag = 'scoped memory for tpu_custom_call.1']
    #allocation7 [shape = 'u8[8192]{0}', space=vmem, size = 0x2000, scoped, tag = 'output window, operand 0']
    %8 = vsyncpa [#allocation3], 0
    %s9 = scalar_lea.sflag [#allocation3], 1
    %10 = vsyncpa %s9, 0
    %11 = vsyncpa [#allocation6], 0
    %12 = vsyncpa [#allocation4], 0
    %s13 = scalar_lea.sflag [#allocation4], 1
    %14 = vsyncpa %s13, 0
    loop: start=0, step=1, limit=4
    $region2: #{tpu_custom_call.1} parent=1 // loop_pre_header
      _
    $region3: #{tpu_custom_call.1} parent=1 // loop_header
      %s16 = sphi 0, %s20
      %p17 = scmp.ge.s32.totalorder %s16, 4
      %s26 = sphi 0, %s28
      %s29 = sphi 0, %s26
      %s30 = sphi 0, %s29
      %s46 = sphi 0, %s30
      %s50 = sphi 0, %s50
      %s52 = sphi 0, %s50
      %s53 = sphi 0, %s52
      %s67 = sphi 0, %s53
      %s71 = sphi 0, %s71
      %s73 = sphi 0, %s71
      %s74 = sphi 0, %s73
      %s88 = sphi 0, %s74
      %s94 = sphi 0, %s96
      %s97 = sphi 0, %s94
      %s98 = sphi 0, %s97
      %s114 = sphi 0, %s98
    $region4: #{tpu_custom_call.1} parent=1 // loop_header_branch
      %19 = sbr.rel (%p17) target = $region8
    $region5: #{tpu_custom_call.1} parent=1 // loop_body
      %s21 = ssub.s32 %s16, 1
      %s22 = ssub.s32 %s16, 2
      %s23 = sadd.s32 %s16, 1
      %s24 = ssub.s32 %s16, %s23
      %p25 = scmp.eq.s32.totalorder %s24, 0
      %s27 = sadd.s32 %s26, 1
      %s28 = scalar_select %p25, %s26, %s27
      %p31 = pneg %p25
      %p32 = scmp.eq.s32.totalorder %s16, 1
      %p33 = por %p31, %p32
      %p34 = scmp.ne.s32.totalorder %s26, %s29
      %p35 = scmp.eq.s32.totalorder %s16, 0
      %p36 = por %p34, %p35
      %p37 = scmp.ne.s32.totalorder %s26, %s29
      %p38 = scmp.eq.s32.totalorder %s21, 1
      %p39 = por %p37, %p38
      %p40 = scmp.ne.s32.totalorder %s29, %s30
      %p41 = scmp.eq.s32.totalorder %s21, 0
      %p42 = por %p40, %p41
      %p43 = scmp.ne.s32.totalorder %s29, %s30
      %p44 = scmp.eq.s32.totalorder %s22, 1
      %p45 = por %p43, %p44
      %p47 = scmp.ne.s32.totalorder %s30, %s46
      %p48 = scmp.eq.s32.totalorder %s22, 0
      %p49 = por %p47, %p48
      %s51 = sadd.s32 %s50, 1
      %p54 = scmp.eq.s32.totalorder %s16, 1
      %p55 = scmp.ne.s32.totalorder %s50, %s52
      %p56 = scmp.eq.s32.totalorder %s16, 0
      %p57 = por %p55, %p56
      %p58 = scmp.ne.s32.totalorder %s50, %s52
      %p59 = scmp.eq.s32.totalorder %s21, 1
      %p60 = por %p58, %p59
      %p61 = scmp.ne.s32.totalorder %s52, %s53
      %p62 = scmp.eq.s32.totalorder %s21, 0
      %p63 = por %p61, %p62
      %p64 = scmp.ne.s32.totalorder %s52, %s53
      %p65 = scmp.eq.s32.totalorder %s22, 1
      %p66 = por %p64, %p65
      %p68 = scmp.ne.s32.totalorder %s53, %s67
      %p69 = scmp.eq.s32.totalorder %s22, 0
      %p70 = por %p68, %p69
      %s72 = sadd.s32 %s71, 1
      %p75 = scmp.eq.s32.totalorder %s16, 1
      %p76 = scmp.ne.s32.totalorder %s71, %s73
      %p77 = scmp.eq.s32.totalorder %s16, 0
      %p78 = por %p76, %p77
      %p79 = scmp.ne.s32.totalorder %s71, %s73
      %p80 = scmp.eq.s32.totalorder %s21, 1
      %p81 = por %p79, %p80
      %p82 = scmp.ne.s32.totalorder %s73, %s74
      %p83 = scmp.eq.s32.totalorder %s21, 0
      %p84 = por %p82, %p83
      %p85 = scmp.ne.s32.totalorder %s73, %s74
      %p86 = scmp.eq.s32.totalorder %s22, 1
      %p87 = por %p85, %p86
      %p89 = scmp.ne.s32.totalorder %s74, %s88
      %p90 = scmp.eq.s32.totalorder %s22, 0
      %p91 = por %p89, %p90
      %s92 = ssub.s32 %s16, %s23
      %p93 = scmp.eq.s32.totalorder %s92, 0
      %s95 = sadd.s32 %s94, 1
      %s96 = scalar_select %p93, %s94, %s95
      %p99 = pneg %p93
      %p100 = scmp.eq.s32.totalorder %s16, 1
      %p101 = por %p99, %p100
      %p102 = scmp.ne.s32.totalorder %s94, %s97
      %p103 = scmp.eq.s32.totalorder %s16, 0
      %p104 = por %p102, %p103
      %p105 = scmp.ne.s32.totalorder %s94, %s97
      %p106 = scmp.eq.s32.totalorder %s21, 1
      %p107 = por %p105, %p106
      %p108 = scmp.ne.s32.totalorder %s97, %s98
      %p109 = scmp.eq.s32.totalorder %s21, 0
      %p110 = por %p108, %p109
      %p111 = scmp.ne.s32.totalorder %s97, %s98
      %p112 = scmp.eq.s32.totalorder %s22, 1
      %p113 = por %p111, %p112
      %p115 = scmp.ne.s32.totalorder %s98, %s114
      %p116 = scmp.eq.s32.totalorder %s22, 0
      %p117 = por %p115, %p116
      %p118 = scmp.le.s32.totalorder 1, %s16
      %p119 = scmp.lt.s32.totalorder %s16, 3
      %p120 = pnand %p118, %p119
      %p121 = pneg %p120
      // Predicated region
      $region9: #{tpu_custom_call.1} parent=5 // pred_check
        _
      $region10: #{tpu_custom_call.1} parent=5 // pred_check_branch
        %123 = sbr.rel (%p120) target = $region12
      $region11: #{tpu_custom_call.1} parent=5 // pred_region
        %s124 = ssub.s32 %s16, 1
        // Predicated region
        $region13: #{tpu_custom_call.1} parent=11 // pred_check
          %p125 = pneg %p63
        $region14: #{tpu_custom_call.1} parent=11 // pred_check_branch
          %127 = sbr.rel (%p125) target = $region16
        $region15: #{tpu_custom_call.1} parent=11 // pred_region
          %129 = vsyncadd [#allocation6], 0
          %s130 = sshll.u32 %s1, 4
          %s131 = int_to_ptr.hbm [resolvable:$true] %s130
          %s132 = sshll.u32 [#allocation5], 4
          %s133 = int_to_ptr.vmem [resolvable:$true] %s132
          %138 = dma.hbm_to_vmem [thread:$0]  %s131, 512, %s133, [#allocation6], 128, 128, 8
        $region16: #{tpu_custom_call.1} parent=11 // pred_fallthru
          _
        // Predicated region
        $region17: #{tpu_custom_call.1} parent=11 // pred_check
          %p139 = pneg %p84
        $region18: #{tpu_custom_call.1} parent=11 // pred_check_branch
          %141 = sbr.rel (%p139) target = $region20
        $region19: #{tpu_custom_call.1} parent=11 // pred_region
          _
        $region20: #{tpu_custom_call.1} parent=11 // pred_fallthru
          _
      $region12: #{tpu_custom_call.1} parent=5 // pred_fallthru
        _
      %p142 = scmp.lt.s32.totalorder %s16, 2
      // Predicated region
      $region21: #{tpu_custom_call.1} parent=5 // pred_check
        %p143 = pneg %p142
      $region22: #{tpu_custom_call.1} parent=5 // pred_check_branch
        %145 = sbr.rel (%p143) target = $region24
      $region23: #{tpu_custom_call.1} parent=5 // pred_region
        // Predicated region
        $region25: #{tpu_custom_call.1} parent=23 // pred_check
          %p146 = pneg %p36
        $region26: #{tpu_custom_call.1} parent=23 // pred_check_branch
          %148 = sbr.rel (%p146) target = $region28
        $region27: #{tpu_custom_call.1} parent=23 // pred_region
          %s149 = sand.u32 %s26, 1
          %s150 = scalar_lea.sflag [#allocation3], %s149
          %s151 = sand.u32 %s26, 1
          %s152 = smul.addr %s151, 8
          %s153 = scalar_lea.vmem [#allocation2], %s152
          %155 = vsyncadd %s150, 0
          %s156 = smul.addr %s16, 8
          %s157 = scalar_lea.hbm %s0, %s156
          %s159 = sshll.u32 %s157, 4
          %s160 = int_to_ptr.hbm [resolvable:$true] %s159
          %s161 = sshll.u32 %s153, 4
          %s162 = int_to_ptr.vmem [resolvable:$true] %s161
          %164 = dma.hbm_to_vmem [thread:$0]  %s160, 128, %s162, %s150
        $region28: #{tpu_custom_call.1} parent=23 // pred_fallthru
          _
      $region24: #{tpu_custom_call.1} parent=5 // pred_fallthru
        _
      %p165 = scmp.le.s32.totalorder 1, %s16
      %p166 = scmp.lt.s32.totalorder %s16, 3
      %p167 = pnand %p165, %p166
      %p168 = pneg %p167
      // Predicated region
      $region29: #{tpu_custom_call.1} parent=5 // pred_check
        _
      $region30: #{tpu_custom_call.1} parent=5 // pred_check_branch
        %170 = sbr.rel (%p167) target = $region32
      $region31: #{tpu_custom_call.1} parent=5 // pred_region
        %s171 = ssub.s32 %s16, 1
        %s172 = sand.u32 %s29, 1
        %s173 = scalar_lea.sflag [#allocation3], %s172
        %s174 = sand.u32 %s29, 1
        %s175 = smul.addr %s174, 8
        %s176 = scalar_lea.vmem [#allocation2], %s175
        // Predicated region
        $region33: #{tpu_custom_call.1} parent=31 // pred_check
          %p177 = pneg %p42
        $region34: #{tpu_custom_call.1} parent=31 // pred_check_branch
          %179 = sbr.rel (%p177) target = $region36
        $region35: #{tpu_custom_call.1} parent=31 // pred_region
          %181 = dma.done %s173, 128
        $region36: #{tpu_custom_call.1} parent=31 // pred_fallthru
          _
        // Predicated region
        $region37: #{tpu_custom_call.1} parent=31 // pred_check
          %p182 = pneg %p63
        $region38: #{tpu_custom_call.1} parent=31 // pred_check_branch
          %184 = sbr.rel (%p182) target = $region40
        $region39: #{tpu_custom_call.1} parent=31 // pred_region
          %186 = dma.done [#allocation6], 512
        $region40: #{tpu_custom_call.1} parent=31 // pred_fallthru
          _
        %s187 = sand.u32 %s29, 1
        %s188 = scalar_lea.sflag [#allocation3], %s187
        %s189 = sand.u32 %s29, 1
        %s190 = smul.addr %s189, 8
        %s191 = scalar_lea.vmem [#allocation2], %s190
        %p192 = pneg %p42
        %p193 = pneg %p39
        %p194 = pneg %p63
        %p195 = pneg %p60
        %p196 = pneg %p84
        %p197 = pneg %p81
        %p198 = pneg %p110
        %p199 = pneg %p107
        %s200 = sand.u32 %s97, 1
        %s201 = scalar_lea.sflag [#allocation4], %s200
        %s202 = sand.u32 %s97, 1
        %s203 = smul.addr %s202, 8
        %s204 = scalar_lea.vmem [#allocation7], %s203
        %v205 = vld [vmem:[%s176] sm:$0xff]
        %v206 = vld [vmem:[#allocation5] sm:$0xff]
        %v207 = vld [vmem:[#allocation5 + $0x8] sm:$0xff]
        %v208 = vld [vmem:[#allocation5 + $0x10] sm:$0xff]
        %v209 = vld [vmem:[#allocation5 + $0x18] sm:$0xff]
        %v210 = vld [vmem:[%s2] sm:$0x1]
        %v212 = vperm.slane %v210, 0
        %vm214 = vcmask 261120
        %v216 = vsel %vm214, %v205, 0
        %218 = vmatpush.msra.mxu0 0.0
        %219 = vmatpush.msra.mxu0 0.0
        %220 = vmatpush.msra.mxu0 0.0
        %221 = vmatpush.msra.mxu0 0.0
        %222 = vmatpush.msra.mxu0 0.0
        %223 = vmatpush.msra.mxu0 0.0
        %224 = vmatpush.msra.mxu0 0.0
        %225 = vmatpush.msra.mxu0 0.0
        %226 = vmatpush.msra.mxu0 0.0
        %227 = vmatpush.msra.mxu0 0.0
        %228 = vmatpush.msra.mxu0 0.0
        %229 = vmatpush.msra.mxu0 0.0
        %230 = vmatpush.msra.mxu0 %v209
        %231 = vmatpush.msra.mxu0 %v208
        %232 = vmatpush.msra.mxu0 %v207
        %233 = vmatpush.msra.mxu0 %v206
        %234 = vmatmul.f32.gmra.mxu0 %v216
        %v235 = vpop.f32.mrf.mxu0
        %v236 = vadd.f32 %v212, %v235
        %237 = vdwg.mxu0
        %vm238 = vcmask 785408
        %239 = vst.msk [vmem:[%s204] sm:$0xff] %vm238, %v236
        %s240 = sand.u32 %s97, 1
        %s241 = scalar_lea.sflag [#allocation4], %s240
        %s242 = sand.u32 %s97, 1
        %s243 = smul.addr %s242, 8
        %s244 = scalar_lea.vmem [#allocation7], %s243
        // Predicated region
        $region41: #{tpu_custom_call.1} parent=31 // pred_check
          %p245 = pneg %p107
        $region42: #{tpu_custom_call.1} parent=31 // pred_check_branch
          %247 = sbr.rel (%p245) target = $region44
        $region43: #{tpu_custom_call.1} parent=31 // pred_region
          %249 = vsyncadd %s241, 0
          %s250 = smul.addr %s21, 8
          %s251 = scalar_lea.hbm %s3, %s250
          %s253 = sshll.u32 %s244, 4
          %s254 = int_to_ptr.vmem [resolvable:$true] %s253
          %s255 = sshll.u32 %s251, 4
          %s256 = int_to_ptr.hbm [resolvable:$true] %s255
          %258 = dma.vmem_to_hbm [thread:$0]  %s254, 128, %s256, %s241
        $region44: #{tpu_custom_call.1} parent=31 // pred_fallthru
          _
      $region32: #{tpu_custom_call.1} parent=5 // pred_fallthru
        _
      %p259 = scmp.le.s32.totalorder 2, %s16
      // Predicated region
      $region45: #{tpu_custom_call.1} parent=5 // pred_check
        %p260 = pneg %p259
      $region46: #{tpu_custom_call.1} parent=5 // pred_check_branch
        %262 = sbr.rel (%p260) target = $region48
      $region47: #{tpu_custom_call.1} parent=5 // pred_region
        %s263 = ssub.s32 %s16, 2
        // Predicated region
        $region49: #{tpu_custom_call.1} parent=47 // pred_check
          %p264 = pneg %p113
        $region50: #{tpu_custom_call.1} parent=47 // pred_check_branch
          %266 = sbr.rel (%p264) target = $region52
        $region51: #{tpu_custom_call.1} parent=47 // pred_region
          %s267 = sand.u32 %s98, 1
          %s268 = scalar_lea.sflag [#allocation4], %s267
          %s269 = sand.u32 %s98, 1
          %s270 = smul.addr %s269, 8
          %s271 = scalar_lea.vmem [#allocation7], %s270
          %273 = dma.done %s268, 128
        $region52: #{tpu_custom_call.1} parent=47 // pred_fallthru
          _
      $region48: #{tpu_custom_call.1} parent=5 // pred_fallthru
        _
    $region6: #{tpu_custom_call.1} parent=1 // loop_footer
      %s20 = sadd.s32 1, %s16
    $region7: #{tpu_custom_call.1} parent=1 // loop_footer_branch
      %15 = sbr.rel target = $region3
    $region8: #{tpu_custom_call.1} parent=1 // loop_exit
      _
    %274 = vsyncpa [#allocation3], 1
    %s275 = scalar_lea.sflag [#allocation3], 1
    %276 = vsyncpa %s275, 1
    %277 = vsyncpa [#allocation6], 1
    %278 = vsyncpa [#allocation4], 1
    %s279 = scalar_lea.sflag [#allocation4], 1
    %280 = vsyncpa %s279, 1

</llo_original>
